<compile_context>
chip_gen: v7x
topology: tpu7x:2x2x1
jax: 0.10.0
libtpu: 0.0.40
codegen_flags: <defaults>
</compile_context>

<pallas_src>
import functools

import jax
import jax.numpy as jnp
import numpy as np
from jax import lax
from jax.experimental import pallas as pl
from jax.experimental.pallas import tpu as pltpu


OUT_CHANNELS = 3 + 3 + 3 + 9 + 3 + 3 + 1   # = 25 (all with_* flags True)
_NSTAT = 13                                # [count, mean_x'(3), E[x'x'^T](9)] moment count
_LANE = 128
_VMEM_LIMIT = 48 * 1024 * 1024             # fits v7x's 64 MiB physical VMEM with headroom


def _round_up(x, m):
    return (x + m - 1) // m * m


def _voxel_centers(coors_f, vx, vy, vz, x_off, y_off, z_off):
    # coors_f: (3, Nt) f32, rows already ordered (x, y, z).
    return jnp.concatenate([
        coors_f[0:1, :] * vx + x_off,
        coors_f[1:2, :] * vy + y_off,
        coors_f[2:3, :] * vz + z_off,
    ], axis=0)


def _reduce_kernel(xyz_ref, coors_ref, vid_ref, partial_ref, *,
                   n_voxels_padded, vx, vy, vz, x_off, y_off, z_off):
    """Phase 1: accumulate per-voxel raw moment sums into this core's partial block."""
    i = pl.program_id(1)                             # tile index within this partial

    @pl.when(i == 0)
    def _init():
        partial_ref[...] = jnp.zeros_like(partial_ref)

    xyz = xyz_ref[...]                               # (3, Nt), rows (x, y, z)
    coors_f = coors_ref[...].astype(jnp.float32)     # (3, Nt), rows (x, y, z)
    vid_row = vid_ref[...]                           # (1, Nt) int32
    n_t = xyz.shape[1]

    cen = _voxel_centers(coors_f, vx, vy, vz, x_off, y_off, z_off)   # (3, Nt)
    xp = xyz - cen                                                   # centered coords

    # Moment rows [1, x', x' (x) x'] -> (13, Nt); outer products built vreg-dense:
    # one full (9, Nt) VPU multiply instead of 9 single-sublane row products.
    ones = jnp.ones((1, n_t), jnp.float32)
    outer9 = jnp.repeat(xp, 3, axis=0) * jnp.tile(xp, (3, 1))        # rows a*3+b = xp_a*xp_b
    mom = jnp.concatenate([ones, xp, outer9], axis=0)                # (13, Nt)

    # One-hot point->voxel assignment in the (Vp, Nt) orientation: the (1, Nt) vid row
    # broadcasts along sublanes (cheap), no lane-sparse (Nt, 1) operand anywhere.
    iota_v = lax.broadcasted_iota(jnp.int32, (n_voxels_padded, n_t), 0)
    assign_t = (iota_v == vid_row).astype(jnp.float32)               # (Vp, Nt)

    # Single fused reduce: contract the shared Nt axis -> (13, Vp), f32 accumulation.
    partial_ref[...] += lax.dot_general(
        mom, assign_t, (((1,), (1,)), ((), ())),
        preferred_element_type=jnp.float32)


def _mapback_kernel(stats_ref, xyz_ref, coors_ref, vid_ref, out_ref, *,
                    n_voxels_padded, vx, vy, vz, x_off, y_off, z_off):
    """Phase 2: map per-voxel stats back to points; emit (25, Nt) lane-dense features."""
    stats = stats_ref[...]                            # (13, Vp) finalized [cnt, mean, cov]
    xyz = xyz_ref[...]                                # (3, Nt)
    coors_f = coors_ref[...].astype(jnp.float32)      # (3, Nt)
    vid_row = vid_ref[...]                            # (1, Nt) int32
    n_t = xyz.shape[1]

    cen = _voxel_centers(coors_f, vx, vy, vz, x_off, y_off, z_off)   # (3, Nt)
    xp = xyz - cen                                                   # xyz - voxel_center

    # One-hot A^T, (Vp, Nt).
    iota_v = lax.broadcasted_iota(jnp.int32, (n_voxels_padded, n_t), 0)
    assign_t = (iota_v == vid_row).astype(jnp.float32)

    # Single fused mapback: (13, Vp) @ (Vp, Nt) -> (13, Nt).
    per_pt = jnp.dot(stats, assign_t, preferred_element_type=jnp.float32)

    counts_pt = per_pt[0:1, :]
    mean_xp = per_pt[1:4, :]                          # cluster mean in centered coords
    cov_pt = per_pt[4:13, :]

    cxyz = cen + mean_xp                              # cluster center
    diff = xp - mean_xp                               # xyz - cluster center

    out_ref[...] = jnp.concatenate(
        [xyz, cxyz, diff, cov_pt, cen, xp, counts_pt], axis=0)       # (25, Nt)


def point_voxel_stats(pts_xyz, pts_coors, vid, *, n_voxels, voxel_size,
                      point_cloud_range, n_tile=1024, num_partials=2,
                      feature_major_out=False):
    """Pallas wrapper reproducing PointVoxelStatsCalculator.forward (all flags True).

    Assumes all vid values are in [0, n_voxels); out-of-range ids would silently alias
    into the padding slot.
    """
    assert n_tile % _LANE == 0, "point tile must be a lane multiple"
    assert num_partials >= 1
    n_pts = pts_xyz.shape[0]
    vx, vy, vz = (float(voxel_size[0]), float(voxel_size[1]), float(voxel_size[2]))
    x_off = vx / 2 + float(point_cloud_range[0])
    y_off = vy / 2 + float(point_cloud_range[1])
    z_off = vz / 2 + float(point_cloud_range[2])

    # Feature-major layout (layout plumbing only): point axis on lanes.
    # TODO(synk): remove these transposes once upstream emits feature-major xyz/coors.
    xyz_t = pts_xyz.astype(jnp.float32).T                     # (3, N)
    coors_t = pts_coors.astype(jnp.int32)[:, ::-1].T          # (3, N), rows (x, y, z)
    vid_i = vid.reshape(-1).astype(jnp.int32)                 # (N,)

    # Pad the point axis to n_tile * num_partials; pad the voxel axis to a lane multiple
    # and give padded points (if any) a spare slot so they never alias a real voxel.
    chunk = n_tile * num_partials
    n_pad_pts = _round_up(max(n_pts, 1), chunk)
    vp = _round_up(n_voxels, _LANE)
    if n_pad_pts != n_pts and vp == n_voxels:
        vp += _LANE
    if n_pad_pts != n_pts:
        pad = n_pad_pts - n_pts
        xyz_t = jnp.pad(xyz_t, ((0, 0), (0, pad)))
        coors_t = jnp.pad(coors_t, ((0, 0), (0, pad)))
        vid_i = jnp.pad(vid_i, (0, pad), constant_values=vp - 1)

    vid_row = vid_i.reshape(1, n_pad_pts)                     # single (1, N) vid layout

    n_tiles = n_pad_pts // n_tile
    tiles_per_partial = n_tiles // num_partials
    kw = dict(n_voxels_padded=vp, vx=vx, vy=vy, vz=vz,
              x_off=x_off, y_off=y_off, z_off=z_off)

    # Phase 1: per-partial tiled reduce into resident (13, Vp) blocks. The leading
    # "parallel" axis gives each TensorCore its own accumulator (v7x megacore split);
    # on single-TC parts it is just a cheap outer loop.
    partials = pl.pallas_call(
        functools.partial(_reduce_kernel, **kw),
        out_shape=jax.ShapeDtypeStruct((num_partials, _NSTAT, vp), jnp.float32),
        grid=(num_partials, tiles_per_partial),
        in_specs=[
            pl.BlockSpec((3, n_tile), lambda p, i: (0, p * tiles_per_partial + i)),
            pl.BlockSpec((3, n_tile), lambda p, i: (0, p * tiles_per_partial + i)),
            pl.BlockSpec((1, n_tile), lambda p, i: (0, p * tiles_per_partial + i)),
        ],
        out_specs=pl.BlockSpec((None, _NSTAT, vp), lambda p, i: (p, 0, 0)),
        compiler_params=pltpu.CompilerParams(
            dimension_semantics=("parallel", "arbitrary"),
            vmem_limit_bytes=_VMEM_LIMIT),
    )(xyz_t, coors_t, vid_row)

    # Tiny finalize (13 x Vp elementwise) in plain JAX: sum partials, normalize raw
    # moment sums to [count, mean, cov].  Exact f32 division (no approx reciprocal).
    sums = partials.sum(axis=0)                               # (13, Vp)
    cnt = sums[0:1, :]
    inv = 1.0 / jnp.maximum(cnt, 1.0)
    mean = sums[1:4, :] * inv                                 # per-voxel mean of x'
    e2 = sums[4:13, :] * inv                                  # per-voxel E[x'x'^T]
    mmt = (mean[:, None, :] * mean[None, :, :]).reshape(9, vp)
    stats = jnp.concatenate([cnt, mean, e2 - mmt], axis=0)    # (13, Vp), centered -> safe

    # Phase 2: tiled mapback, lane-dense (25, N) output, point tiles parallel.
    out_t = pl.pallas_call(
        functools.partial(_mapback_kernel, **kw),
        out_shape=jax.ShapeDtypeStruct((OUT_CHANNELS, n_pad_pts), jnp.float32),
        grid=(n_tiles,),
        in_specs=[
            pl.BlockSpec((_NSTAT, vp), lambda i: (0, 0)),
            pl.BlockSpec((3, n_tile), lambda i: (0, i)),
            pl.BlockSpec((3, n_tile), lambda i: (0, i)),
            pl.BlockSpec((1, n_tile), lambda i: (0, i)),
        ],
        out_specs=pl.BlockSpec((OUT_CHANNELS, n_tile), lambda i: (0, i)),
        compiler_params=pltpu.CompilerParams(
            dimension_semantics=("parallel",),
            vmem_limit_bytes=_VMEM_LIMIT),
    )(stats, xyz_t, coors_t, vid_row)

    if feature_major_out:
        return out_t[:, :n_pts]                               # (25, N): consumer folds T
    # Default: the module's (N, 25) point-major contract; drop point padding.
    return out_t.T[:n_pts]


def _reference(pts_xyz, pts_coors, vid, *, n_voxels, voxel_size, point_cloud_range):
    """Pure-JAX reference mirroring the PyTorch forward (segment mean + mapback)."""
    vx, vy, vz = (float(voxel_size[0]), float(voxel_size[1]), float(voxel_size[2]))
    x_off = vx / 2 + float(point_cloud_range[0])
    y_off = vy / 2 + float(point_cloud_range[1])
    z_off = vz / 2 + float(point_cloud_range[2])
    n_pts = pts_xyz.shape[0]

    counts = jax.ops.segment_sum(jnp.ones((n_pts,), jnp.float32), vid,
                                 num_segments=n_voxels)
    counts_safe = jnp.maximum(counts, 1.0)
    mean_xyz = jax.ops.segment_sum(pts_xyz, vid, num_segments=n_voxels) \
        / counts_safe[:, None]
    cxyz = mean_xyz[vid]
    diff = pts_xyz - cxyz
    outer = (diff[:, None, :] * diff[:, :, None]).reshape(n_pts, 9)
    cov_mean = jax.ops.segment_sum(outer, vid, num_segments=n_voxels) \
        / counts_safe[:, None]
    cov = cov_mean[vid]
    cf = pts_coors.astype(jnp.float32)
    centers = jnp.stack([cf[:, 2] * vx + x_off,
                         cf[:, 1] * vy + y_off,
                         cf[:, 0] * vz + z_off], axis=-1)
    counts_pt = counts[vid][:, None]
    return jnp.concatenate(
        [pts_xyz, cxyz, diff, cov, centers, pts_xyz - centers, counts_pt], axis=-1)


if __name__ == "__main__":
    # Deterministic "config parameters" (module __init__ args — no learnable weights).
    voxel_size = (0.5, 0.5, 0.5)
    point_cloud_range = (0.0, 0.0, 0.0, 2.0, 2.0, 2.0)
    nx = ny = nz = 4                       # 4 x 4 x 4 voxel grid
    n_voxels = nx * ny * nz                # 64 (padded to 128 lanes inside the wrapper)
    n_pts = 512

    key = jax.random.PRNGKey(0)
    pts_xyz = jax.random.uniform(key, (n_pts, 3), jnp.float32,
                                 minval=0.0, maxval=2.0)

    # Voxelize (the "Scatter" construction, plain-JAX glue).
    ix = jnp.clip((pts_xyz[:, 0] / voxel_size[0]).astype(jnp.int32), 0, nx - 1)
    iy = jnp.clip((pts_xyz[:, 1] / voxel_size[1]).astype(jnp.int32), 0, ny - 1)
    iz = jnp.clip((pts_xyz[:, 2] / voxel_size[2]).astype(jnp.int32), 0, nz - 1)
    pts_coors = jnp.stack([iz, iy, ix], axis=-1).astype(jnp.int32)   # (z, y, x)
    vid = (iz * ny * nx + iy * nx + ix).astype(jnp.int32)

    # Small tile so the toy shapes still exercise both the partial axis (2) and the
    # multi-step accumulator axis (2 tiles per partial).
    out = point_voxel_stats(pts_xyz, pts_coors, vid,
                            n_voxels=n_voxels, voxel_size=voxel_size,
                            point_cloud_range=point_cloud_range,
                            n_tile=128, num_partials=2)
    out = jax.block_until_ready(out)

    ref = _reference(pts_xyz, pts_coors, vid,
                     n_voxels=n_voxels, voxel_size=voxel_size,
                     point_cloud_range=point_cloud_range)

    assert out.shape == (n_pts, OUT_CHANNELS), out.shape
    np.testing.assert_allclose(np.asarray(out), np.asarray(ref),
                               rtol=1e-4, atol=1e-4)
    print("KERNEL_OK")
</pallas_src>

<mosaic_0001>
module attributes {stable_mosaic.version = 11 : i64} {
  func.func @_reduce_kernel(%arg0: i32, %arg1: i32, %arg2: memref<3x128xf32, #tpu.memory_space<vmem>>, %arg3: memref<3x128xi32, #tpu.memory_space<vmem>>, %arg4: memref<1x128xi32, #tpu.memory_space<vmem>>, %arg5: memref<1x13x128xf32, #tpu.memory_space<vmem>>) attributes {dimension_semantics = [#tpu.dimension_semantics<parallel>, #tpu.dimension_semantics<arbitrary>], iteration_bounds = array<i64: 2, 2>, scalar_prefetch = 0 : i64, scratch_operands = 0 : i64, tpu.core_type = #tpu.core_type<tc>, window_params = [{transform_indices = @transform_0, window_bounds = array<i64: 3, 128>}, {transform_indices = @transform_1, window_bounds = array<i64: 3, 128>}, {transform_indices = @transform_2, window_bounds = array<i64: 1, 128>}, {transform_indices = @transform_3, window_bounds = array<i64: 1, 13, 128>}]} {
    %c0_i32 = arith.constant 0 : i32
    %0 = arith.cmpi eq, %arg1, %c0_i32 : i32
    %1 = arith.extui %0 : i1 to i32
    %c0_i32_0 = arith.constant 0 : i32
    %2 = arith.cmpi ne, %1, %c0_i32_0 : i32
    scf.if %2 {
      %cst_19 = arith.constant 0.000000e+00 : f32
      %43 = vector.broadcast %cst_19 : f32 to vector<13x128xf32>
      %c0_20 = arith.constant 0 : index
      %c0_21 = arith.constant 0 : index
      %c0_22 = arith.constant 0 : index
      %44 = vector.load %arg5[%c0_20, %c0_21, %c0_22] : memref<1x13x128xf32, #tpu.memory_space<vmem>>, vector<1x13x128xf32>
      %45 = vector.shape_cast %44 : vector<1x13x128xf32> to vector<13x128xf32>
      %46 = vector.shape_cast %43 : vector<13x128xf32> to vector<1x13x128xf32>
      tpu.vector_store %arg5[%c0_20, %c0_21, %c0_22], %46 {strides = array<i32>} : memref<1x13x128xf32, #tpu.memory_space<vmem>>, vector<1x13x128xf32>,
    } else {
    }
    %c0 = arith.constant 0 : index
    %c0_1 = arith.constant 0 : index
    %3 = vector.load %arg2[%c0, %c0_1] : memref<3x128xf32, #tpu.memory_space<vmem>>, vector<3x128xf32>
    %c0_2 = arith.constant 0 : index
    %c0_3 = arith.constant 0 : index
    %4 = vector.load %arg3[%c0_2, %c0_3] : memref<3x128xi32, #tpu.memory_space<vmem>>, vector<3x128xi32>
    %5 = arith.sitofp %4 : vector<3x128xi32> to vector<3x128xf32>
    %c0_4 = arith.constant 0 : index
    %c0_5 = arith.constant 0 : index
    %6 = vector.load %arg4[%c0_4, %c0_5] : memref<1x128xi32, #tpu.memory_space<vmem>>, vector<1x128xi32>
    %7 = vector.extract_strided_slice %5 {offsets = [0, 0], sizes = [1, 128], strides = [1, 1]} : vector<3x128xf32> to vector<1x128xf32>
    %cst = arith.constant 5.000000e-01 : f32
    %8 = vector.broadcast %cst : f32 to vector<1x128xf32>
    %9 = arith.mulf %7, %8 : vector<1x128xf32>
    %cst_6 = arith.constant 2.500000e-01 : f32
    %10 = vector.broadcast %cst_6 : f32 to vector<1x128xf32>
    %11 = arith.addf %9, %10 : vector<1x128xf32>
    %12 = vector.extract_strided_slice %5 {offsets = [1, 0], sizes = [1, 128], strides = [1, 1]} : vector<3x128xf32> to vector<1x128xf32>
    %cst_7 = arith.constant 5.000000e-01 : f32
    %13 = vector.broadcast %cst_7 : f32 to vector<1x128xf32>
    %14 = arith.mulf %12, %13 : vector<1x128xf32>
    %cst_8 = arith.constant 2.500000e-01 : f32
    %15 = vector.broadcast %cst_8 : f32 to vector<1x128xf32>
    %16 = arith.addf %14, %15 : vector<1x128xf32>
    %17 = vector.extract_strided_slice %5 {offsets = [2, 0], sizes = [1, 128], strides = [1, 1]} : vector<3x128xf32> to vector<1x128xf32>
    %cst_9 = arith.constant 5.000000e-01 : f32
    %18 = vector.broadcast %cst_9 : f32 to vector<1x128xf32>
    %19 = arith.mulf %17, %18 : vector<1x128xf32>
    %cst_10 = arith.constant 2.500000e-01 : f32
    %20 = vector.broadcast %cst_10 : f32 to vector<1x128xf32>
    %21 = arith.addf %19, %20 : vector<1x128xf32>
    %22 = tpu.concatenate %11, %16, %21 in 0 : vector<1x128xf32>, vector<1x128xf32>, vector<1x128xf32> -> vector<3x128xf32>
    %23 = arith.subf %3, %22 : vector<3x128xf32>
    %cst_11 = arith.constant 1.000000e+00 : f32
    %24 = vector.broadcast %cst_11 : f32 to vector<1x128xf32>
    %25 = vector.shape_cast %23 : vector<3x128xf32> to vector<3x1x128xf32>
    %26 = vector.broadcast %25 : vector<3x1x128xf32> to vector<3x3x128xf32>
    %27 = vector.shape_cast %26 : vector<3x3x128xf32> to vector<9x128xf32>
    %28 = tpu.concatenate %23, %23, %23 in 0 : vector<3x128xf32>, vector<3x128xf32>, vector<3x128xf32> -> vector<9x128xf32>
    %29 = arith.mulf %27, %28 : vector<9x128xf32>
    %30 = tpu.concatenate %24, %23, %29 in 0 : vector<1x128xf32>, vector<3x128xf32>, vector<9x128xf32> -> vector<13x128xf32>
    %31 = tpu.iota {dimensions = array<i32: 0>} : vector<128x128xi32>
    %32 = vector.broadcast %6 : vector<1x128xi32> to vector<128x128xi32>
    %33 = arith.cmpi eq, %31, %32 : vector<128x128xi32>
    %34 = arith.extui %33 : vector<128x128xi1> to vector<128x128xi32>
    %35 = arith.sitofp %34 : vector<128x128xi32> to vector<128x128xf32>
    %c0_12 = arith.constant 0 : index
    %c0_13 = arith.constant 0 : index
    %c0_14 = arith.constant 0 : index
    %36 = vector.load %arg5[%c0_12, %c0_13, %c0_14] : memref<1x13x128xf32, #tpu.memory_space<vmem>>, vector<1x13x128xf32>
    %37 = vector.shape_cast %36 : vector<1x13x128xf32> to vector<13x128xf32>
    %cst_15 = arith.constant dense<0.000000e+00> : vector<13x128xf32>
    %38 = tpu.matmul %30, %35, %cst_15 {dimension_numbers = #tpu.dot_dimension_numbers<[1], [1], [0], [0], [0, 0, 1, 0], [], []>} : vector<13x128xf32>, vector<128x128xf32>, vector<13x128xf32> -> vector<13x128xf32>
    %39 = arith.addf %37, %38 : vector<13x128xf32>
    %c0_16 = arith.constant 0 : index
    %c0_17 = arith.constant 0 : index
    %c0_18 = arith.constant 0 : index
    %40 = vector.load %arg5[%c0_16, %c0_17, %c0_18] : memref<1x13x128xf32, #tpu.memory_space<vmem>>, vector<1x13x128xf32>
    %41 = vector.shape_cast %40 : vector<1x13x128xf32> to vector<13x128xf32>
    %42 = vector.shape_cast %39 : vector<13x128xf32> to vector<1x13x128xf32>
    tpu.vector_store %arg5[%c0_16, %c0_17, %c0_18], %42 {strides = array<i32>} : memref<1x13x128xf32, #tpu.memory_space<vmem>>, vector<1x13x128xf32>,
    return
  }
  func.func @transform_0(%arg0: i32, %arg1: i32) -> (i32, i32) {
    %c2_i32 = arith.constant 2 : i32
    %0 = arith.muli %arg0, %c2_i32 : i32
    %1 = arith.addi %0, %arg1 : i32
    %c0_i32 = arith.constant 0 : i32
    %c0_i32_0 = arith.constant 0 : i32
    return %c0_i32, %1 : i32, i32
  }
  func.func @transform_1(%arg0: i32, %arg1: i32) -> (i32, i32) {
    %c2_i32 = arith.constant 2 : i32
    %0 = arith.muli %arg0, %c2_i32 : i32
    %1 = arith.addi %0, %arg1 : i32
    %c0_i32 = arith.constant 0 : i32
    %c0_i32_0 = arith.constant 0 : i32
    return %c0_i32, %1 : i32, i32
  }
  func.func @transform_2(%arg0: i32, %arg1: i32) -> (i32, i32) {
    %c2_i32 = arith.constant 2 : i32
    %0 = arith.muli %arg0, %c2_i32 : i32
    %1 = arith.addi %0, %arg1 : i32
    %c0_i32 = arith.constant 0 : i32
    %c0_i32_0 = arith.constant 0 : i32
    return %c0_i32, %1 : i32, i32
  }
  func.func @transform_3(%arg0: i32, %arg1: i32) -> (i32, i32, i32) {
    %c0_i32 = arith.constant 0 : i32
    %c0_i32_0 = arith.constant 0 : i32
    %c0_i32_1 = arith.constant 0 : i32
    return %arg0, %c0_i32, %c0_i32_0 : i32, i32, i32
  }
}

</mosaic_0001>

<llo_original>
// kernel: tpu_custom_call.1
$region0: #{tpu_custom_call.1}
  #allocation0 [shape = 'u32[]', space=smem, size = 0x4, offset = 0x4, fixed_abs, tag = 'smem constant byte address 0x4 - core index']
  #allocation1 [shape = 'u32[144,128]{1,0:T(1,128)}', space=vmem, size = 0x12000, scoped, tag = 'internal scratch']
  %s0 = inlined_call_operand.hbm [shape: f32[3,512], index: 0, kind: input, shape index: {}]
  %s1 = inlined_call_operand.hbm [shape: s32[3,512], index: 1, kind: input, shape index: {}]
  %s2 = inlined_call_operand.vmem [shape: s32[1,512], index: 2, kind: input, shape index: {}]
  %s3 = inlined_call_operand.vmem [shape: f32[2,13,128], index: 3, kind: output, shape index: {}]
  %s4 = sld [smem:[#allocation0]]
  $region57: #{tpu_custom_call.1} parent=0
    _
  %s6 = ssub.s32 1, %s4
  %s7 = scalar_select 0, %s6, %s4
  $region1: #{tpu_custom_call.1} parent=0
    #allocation2 [shape = 'u8[4096]{0}', space=vmem, size = 0x1000, scoped, tag = 'input window, operand 0']
    #allocation3 [shape = 's32[2]{0}', space=sflag, size = 0x8, scoped, tag = 'scoped memory for tpu_custom_call.1']
    #allocation4 [shape = 'u8[4096]{0}', space=vmem, size = 0x1000, scoped, tag = 'input window, operand 1']
    #allocation5 [shape = 's32[2]{0}', space=sflag, size = 0x8, scoped, tag = 'scoped memory for tpu_custom_call.1']
    %8 = vsyncpa [#allocation3], 0
    %s9 = scalar_lea.sflag [#allocation3], 1
    %10 = vsyncpa %s9, 0
    %11 = vsyncpa [#allocation5], 0
    %s12 = scalar_lea.sflag [#allocation5], 1
    %13 = vsyncpa %s12, 0
    loop: start=0, step=1, limit=6
    $region2: #{tpu_custom_call.1} parent=1 // loop_pre_header
      _
    $region3: #{tpu_custom_call.1} parent=1 // loop_header
      %s15 = sphi 0, %s19
      %p16 = scmp.ge.s32.totalorder %s15, 6
      %s22 = sphi 0, %s34
      %s23 = sphi 0, %s30
      %s24 = sphi 0, %s22
      %s25 = sphi 0, %s23
      %s26 = sphi 0, %s24
      %s27 = sphi 0, %s25
      %s41 = sphi 0, %s43
      %s44 = sphi 0, %s41
      %s45 = sphi 0, %s44
      %s61 = sphi 0, %s45
      %s71 = sphi 0, %s73
      %s74 = sphi 0, %s71
      %s75 = sphi 0, %s74
      %s91 = sphi 0, %s75
      %s101 = sphi 0, %s103
      %s104 = sphi 0, %s101
      %s105 = sphi 0, %s104
      %s121 = sphi 0, %s105
      %s127 = sphi 0, %s129
      %s130 = sphi 0, %s127
      %s131 = sphi 0, %s130
      %s147 = sphi 0, %s131
    $region4: #{tpu_custom_call.1} parent=1 // loop_header_branch
      %18 = sbr.rel (%p16) target = $region8
    $region5: #{tpu_custom_call.1} parent=1 // loop_body
      %s20 = ssub.s32 %s15, 1
      %s21 = ssub.s32 %s15, 2
      %s28 = sadd.s32 1, %s23
      %p29 = scmp.ge.s32.totalorder %s28, 2
      %s30 = scalar_select %p29, 0, %s28
      %s31 = sadd.s32 1, %s22
      %s32 = scalar_select %p29, %s31, %s22
      %p33 = scmp.ge.s32.totalorder %s32, 2
      %s34 = scalar_select %p33, 0, %s32
      %s35 = smul.u32 %s22, 2
      %s36 = sadd.s32 %s35, %s23
      %s37 = smul.u32 %s34, 2
      %s38 = sadd.s32 %s37, %s30
      %s39 = ssub.s32 %s36, %s38
      %p40 = scmp.eq.s32.totalorder %s39, 0
      %s42 = sadd.s32 %s41, 1
      %s43 = scalar_select %p40, %s41, %s42
      %p46 = pneg %p40
      %p47 = scmp.eq.s32.totalorder %s15, 3
      %p48 = por %p46, %p47
      %p49 = scmp.ne.s32.totalorder %s41, %s44
      %p50 = scmp.eq.s32.totalorder %s15, 0
      %p51 = por %p49, %p50
      %p52 = scmp.ne.s32.totalorder %s41, %s44
      %p53 = scmp.eq.s32.totalorder %s20, 3
      %p54 = por %p52, %p53
      %p55 = scmp.ne.s32.totalorder %s44, %s45
      %p56 = scmp.eq.s32.totalorder %s20, 0
      %p57 = por %p55, %p56
      %p58 = scmp.ne.s32.totalorder %s44, %s45
      %p59 = scmp.eq.s32.totalorder %s21, 3
      %p60 = por %p58, %p59
      %p62 = scmp.ne.s32.totalorder %s45, %s61
      %p63 = scmp.eq.s32.totalorder %s21, 0
      %p64 = por %p62, %p63
      %s65 = smul.u32 %s22, 2
      %s66 = sadd.s32 %s65, %s23
      %s67 = smul.u32 %s34, 2
      %s68 = sadd.s32 %s67, %s30
      %s69 = ssub.s32 %s66, %s68
      %p70 = scmp.eq.s32.totalorder %s69, 0
      %s72 = sadd.s32 %s71, 1
      %s73 = scalar_select %p70, %s71, %s72
      %p76 = pneg %p70
      %p77 = scmp.eq.s32.totalorder %s15, 3
      %p78 = por %p76, %p77
      %p79 = scmp.ne.s32.totalorder %s71, %s74
      %p80 = scmp.eq.s32.totalorder %s15, 0
      %p81 = por %p79, %p80
      %p82 = scmp.ne.s32.totalorder %s71, %s74
      %p83 = scmp.eq.s32.totalorder %s20, 3
      %p84 = por %p82, %p83
      %p85 = scmp.ne.s32.totalorder %s74, %s75
      %p86 = scmp.eq.s32.totalorder %s20, 0
      %p87 = por %p85, %p86
      %p88 = scmp.ne.s32.totalorder %s74, %s75
      %p89 = scmp.eq.s32.totalorder %s21, 3
      %p90 = por %p88, %p89
      %p92 = scmp.ne.s32.totalorder %s75, %s91
      %p93 = scmp.eq.s32.totalorder %s21, 0
      %p94 = por %p92, %p93
      %s95 = smul.u32 %s22, 2
      %s96 = sadd.s32 %s95, %s23
      %s97 = smul.u32 %s34, 2
      %s98 = sadd.s32 %s97, %s30
      %s99 = ssub.s32 %s96, %s98
      %p100 = scmp.eq.s32.totalorder %s99, 0
      %s102 = sadd.s32 %s101, 1
      %s103 = scalar_select %p100, %s101, %s102
      %p106 = pneg %p100
      %p107 = scmp.eq.s32.totalorder %s15, 3
      %p108 = por %p106, %p107
      %p109 = scmp.ne.s32.totalorder %s101, %s104
      %p110 = scmp.eq.s32.totalorder %s15, 0
      %p111 = por %p109, %p110
      %p112 = scmp.ne.s32.totalorder %s101, %s104
      %p113 = scmp.eq.s32.totalorder %s20, 3
      %p114 = por %p112, %p113
      %p115 = scmp.ne.s32.totalorder %s104, %s105
      %p116 = scmp.eq.s32.totalorder %s20, 0
      %p117 = por %p115, %p116
      %p118 = scmp.ne.s32.totalorder %s104, %s105
      %p119 = scmp.eq.s32.totalorder %s21, 3
      %p120 = por %p118, %p119
      %p122 = scmp.ne.s32.totalorder %s105, %s121
      %p123 = scmp.eq.s32.totalorder %s21, 0
      %p124 = por %p122, %p123
      %s125 = ssub.s32 %s22, %s34
      %p126 = scmp.eq.s32.totalorder %s125, 0
      %s128 = sadd.s32 %s127, 1
      %s129 = scalar_select %p126, %s127, %s128
      %p132 = pneg %p126
      %p133 = scmp.eq.s32.totalorder %s15, 3
      %p134 = por %p132, %p133
      %p135 = scmp.ne.s32.totalorder %s127, %s130
      %p136 = scmp.eq.s32.totalorder %s15, 0
      %p137 = por %p135, %p136
      %p138 = scmp.ne.s32.totalorder %s127, %s130
      %p139 = scmp.eq.s32.totalorder %s20, 3
      %p140 = por %p138, %p139
      %p141 = scmp.ne.s32.totalorder %s130, %s131
      %p142 = scmp.eq.s32.totalorder %s20, 0
      %p143 = por %p141, %p142
      %p144 = scmp.ne.s32.totalorder %s130, %s131
      %p145 = scmp.eq.s32.totalorder %s21, 3
      %p146 = por %p144, %p145
      %p148 = scmp.ne.s32.totalorder %s131, %s147
      %p149 = scmp.eq.s32.totalorder %s21, 0
      %p150 = por %p148, %p149
      %p151 = scmp.le.s32.totalorder 1, %s15
      %p152 = scmp.lt.s32.totalorder %s15, 5
      %p153 = pnand %p151, %p152
      %p154 = pneg %p153
      // Predicated region
      $region9: #{tpu_custom_call.1} parent=5 // pred_check
        _
      $region10: #{tpu_custom_call.1} parent=5 // pred_check_branch
        %156 = sbr.rel (%p153) target = $region12
      $region11: #{tpu_custom_call.1} parent=5 // pred_region
        %s157 = ssub.s32 %s15, 1
      $region12: #{tpu_custom_call.1} parent=5 // pred_fallthru
        _
      %p158 = scmp.lt.s32.totalorder %s15, 4
      // Predicated region
      $region13: #{tpu_custom_call.1} parent=5 // pred_check
        %p159 = pneg %p158
      $region14: #{tpu_custom_call.1} parent=5 // pred_check_branch
        %161 = sbr.rel (%p159) target = $region16
      $region15: #{tpu_custom_call.1} parent=5 // pred_region
        // Predicated region
        $region17: #{tpu_custom_call.1} parent=15 // pred_check
          %p162 = pneg %p51
        $region18: #{tpu_custom_call.1} parent=15 // pred_check_branch
          %164 = sbr.rel (%p162) target = $region20
        $region19: #{tpu_custom_call.1} parent=15 // pred_region
          %s165 = sand.u32 %s41, 1
          %s166 = scalar_lea.sflag [#allocation3], %s165
          %s167 = sand.u32 %s41, 1
          %s168 = smul.addr %s167, 4
          %s169 = scalar_lea.vmem [#allocation2], %s168
          %s170 = smul.u32 %s22, 2
          %s171 = sadd.s32 %s170, %s23
          %s173 = ssub.s32 64, 64
          %174 = vsyncadd %s166, %s173
          %s175 = smul.addr %s171, 64
          %s176 = scalar_lea.hbm %s0, %s175
          %s178 = sshll.u32 %s169, 4
          %s179 = int_to_ptr.vmem [resolvable:$true] %s178
          %181 = dma.hbm_to_vmem [thread:$0]  %s176, 64, %s179, %s166
        $region20: #{tpu_custom_call.1} parent=15 // pred_fallthru
          _
        // Predicated region
        $region21: #{tpu_custom_call.1} parent=15 // pred_check
          %p182 = pneg %p81
        $region22: #{tpu_custom_call.1} parent=15 // pred_check_branch
          %184 = sbr.rel (%p182) target = $region24
        $region23: #{tpu_custom_call.1} parent=15 // pred_region
          %s185 = sand.u32 %s71, 1
          %s186 = scalar_lea.sflag [#allocation5], %s185
          %s187 = sand.u32 %s71, 1
          %s188 = smul.addr %s187, 4
          %s189 = scalar_lea.vmem [#allocation4], %s188
          %s190 = smul.u32 %s22, 2
          %s191 = sadd.s32 %s190, %s23
          %s193 = ssub.s32 64, 64
          %194 = vsyncadd %s186, %s193
          %s195 = smul.addr %s191, 64
          %s196 = scalar_lea.hbm %s1, %s195
          %s198 = sshll.u32 %s189, 4
          %s199 = int_to_ptr.vmem [resolvable:$true] %s198
          %201 = dma.hbm_to_vmem [thread:$0]  %s196, 64, %s199, %s186
        $region24: #{tpu_custom_call.1} parent=15 // pred_fallthru
          _
        // Predicated region
        $region25: #{tpu_custom_call.1} parent=15 // pred_check
          %p202 = pneg %p111
        $region26: #{tpu_custom_call.1} parent=15 // pred_check_branch
          %204 = sbr.rel (%p202) target = $region28
        $region27: #{tpu_custom_call.1} parent=15 // pred_region
          %s205 = smul.u32 %s22, 2
          %s206 = sadd.s32 %s205, %s23
          %p207 = scmp.lt.s32.totalorder %s206, 3
          %s208 = scalar_select %p207, %s206, 3
          %s209 = scalar_lea.vmem %s2, %s208
          %s210 = smul.u32 %s22, 2
          %s211 = sadd.s32 %s210, %s23
        $region28: #{tpu_custom_call.1} parent=15 // pred_fallthru
          _
      $region16: #{tpu_custom_call.1} parent=5 // pred_fallthru
        _
      %p212 = scmp.le.s32.totalorder 1, %s15
      %p213 = scmp.lt.s32.totalorder %s15, 5
      %p214 = pnand %p212, %p213
      %p215 = pneg %p214
      // Predicated region
      $region29: #{tpu_custom_call.1} parent=5 // pred_check
        _
      $region30: #{tpu_custom_call.1} parent=5 // pred_check_branch
        %217 = sbr.rel (%p214) target = $region32
      $region31: #{tpu_custom_call.1} parent=5 // pred_region
        %s218 = ssub.s32 %s15, 1
        %s219 = sand.u32 %s44, 1
        %s220 = scalar_lea.sflag [#allocation3], %s219
        %s221 = sand.u32 %s44, 1
        %s222 = smul.addr %s221, 4
        %s223 = scalar_lea.vmem [#allocation2], %s222
        // Predicated region
        $region33: #{tpu_custom_call.1} parent=31 // pred_check
          %p224 = pneg %p57
        $region34: #{tpu_custom_call.1} parent=31 // pred_check_branch
          %226 = sbr.rel (%p224) target = $region36
        $region35: #{tpu_custom_call.1} parent=31 // pred_region
          %227 = dma.done %s220, 64
        $region36: #{tpu_custom_call.1} parent=31 // pred_fallthru
          _
        %s228 = sand.u32 %s74, 1
        %s229 = scalar_lea.sflag [#allocation5], %s228
        %s230 = sand.u32 %s74, 1
        %s231 = smul.addr %s230, 4
        %s232 = scalar_lea.vmem [#allocation4], %s231
        // Predicated region
        $region37: #{tpu_custom_call.1} parent=31 // pred_check
          %p233 = pneg %p87
        $region38: #{tpu_custom_call.1} parent=31 // pred_check_branch
          %235 = sbr.rel (%p233) target = $region40
        $region39: #{tpu_custom_call.1} parent=31 // pred_region
          %236 = dma.done %s229, 64
        $region40: #{tpu_custom_call.1} parent=31 // pred_fallthru
          _
        %s237 = sand.u32 %s44, 1
        %s238 = scalar_lea.sflag [#allocation3], %s237
        %s239 = sand.u32 %s44, 1
        %s240 = smul.addr %s239, 4
        %s241 = scalar_lea.vmem [#allocation2], %s240
        %p242 = pneg %p57
        %p243 = pneg %p54
        %s244 = sand.u32 %s74, 1
        %s245 = scalar_lea.sflag [#allocation5], %s244
        %s246 = sand.u32 %s74, 1
        %s247 = smul.addr %s246, 4
        %s248 = scalar_lea.vmem [#allocation4], %s247
        %p249 = pneg %p87
        %p250 = pneg %p84
        %s251 = smul.u32 %s24, 2
        %s252 = sadd.s32 %s251, %s25
        %p253 = scmp.lt.s32.totalorder %s252, 3
        %s254 = scalar_select %p253, %s252, 3
        %s255 = scalar_lea.vmem %s2, %s254
        %p256 = pneg %p117
        %p257 = pneg %p114
        %p258 = pneg %p143
        %p259 = pneg %p140
        %p260 = scmp.lt.s32.totalorder %s24, 1
        %s261 = scalar_select %p260, %s24, 1
        %s262 = smul.addr %s261, 2
        %s263 = smul.addr %s262, 8
        %s264 = scalar_lea.vmem %s3, %s263
        %s265 = smul.u32 %s24, 2
        %s266 = sadd.s32 %s265, %s25
        %s267 = smul.u32 %s24, 2
        %s268 = sadd.s32 %s267, %s25
        %s269 = smul.u32 %s24, 2
        %s270 = sadd.s32 %s269, %s25
        %p271 = scmp.lt.s32.totalorder %s270, 3
        %s272 = scalar_select %p271, %s270, 3
        %s273 = scalar_lea.vmem %s2, %s272
        %s274 = smul.u32 %s24, 2
        %s275 = sadd.s32 %s274, %s25
        %p276 = scmp.lt.s32.totalorder %s24, 1
        %s277 = scalar_select %p276, %s24, 1
        %s278 = smul.addr %s277, 2
        %s279 = smul.addr %s278, 8
        %s280 = scalar_lea.vmem %s3, %s279
        %p281 = scmp.eq.s32.totalorder %s25, 0
        // Predicated region
        $region41: #{tpu_custom_call.1} parent=31 // pred_check
          %p282 = pneg %p281
        $region42: #{tpu_custom_call.1} parent=31 // pred_check_branch
          %284 = sbr.rel (%p282) target = $region44
        $region43: #{tpu_custom_call.1} parent=31 // pred_region
          %285 = vst [vmem:[%s280] sm:$0xff] 0.0
          %286 = vst [vmem:[%s280 + $0x8] sm:$0x1f] 0.0
        $region44: #{tpu_custom_call.1} parent=31 // pred_fallthru
          _
        %v287 = vld [vmem:[%s223] sm:$0x7]
        %v288 = vld [vmem:[%s232] sm:$0x7]
        %v289 = vcvt.s32.f32 %v288
        %v290 = vld [vmem:[%s273] sm:$0x1]
        %v291 = vmul.f32 %v289, 0.5
        %v292 = vadd.f32 %v291, 0.25
        %vm293 = vcmask 1040384
        %vm294 = vcmask 1041408
        %v295 = vsel %vm294, %v292, %v292
        %v296 = vsub.f32 %v287, %v295
        %v299 = vunpack.c.l.s4 1966171168
        %v300 = vunpack.c.0.s8 %v299
        %v301 = vlaneseq
        %v302 = vshrl.u32 %v301, 7
        %v303 = vsub.s32 %v300, %v302
        %v304 = vrot.slane %v296, %v303
        %v305 = vcombine.high %v304, %v304
        %v307 = vunpack.c.l.s4 1966171168
        %v308 = vunpack.c.0.s8 %v307
        %v309 = vlaneseq
        %v310 = vshrl.u32 %v309, 7
        %v311 = vsub.s32 %v308, %v310
        %v312 = vrot.slane %v304, %v311
        %v314 = vunpack.c.l.s4 1966171168
        %v315 = vunpack.c.0.s8 %v314
        %v316 = vlaneseq
        %v317 = vshrl.u32 %v316, 7
        %v318 = vsub.s32 %v315, %v317
        %v319 = vrot.slane %v305, %v318
        %v320 = vcombine.high %v312, %v312
        %v321 = vlaneseq
        %v322 = vshrl.u32 %v321, 7
        %v323 = vsub.s32 0, %v322
        %v324 = vrot.slane %v312, %v323
        %v325 = vlaneseq
        %v326 = vshrl.u32 %v325, 7
        %v327 = vsub.s32 0, %v326
        %v328 = vrot.slane %v319, %v327
        %v329 = vlaneseq
        %v330 = vshrl.u32 %v329, 7
        %v331 = vsub.s32 0, %v330
        %v332 = vrot.slane %v320, %v331
        %v334 = vunpack.c.l.s4 1966171168
        %v335 = vunpack.c.0.s8 %v334
        %v336 = vlaneseq
        %v337 = vshrl.u32 %v336, 7
        %v338 = vsub.s32 %v335, %v337
        %v339 = vrot.slane %v324, %v338
        %v340 = vcombine.high %v339, %v339
        %v342 = vunpack.c.l.s4 1966171168
        %v343 = vunpack.c.0.s8 %v342
        %v344 = vlaneseq
        %v345 = vshrl.u32 %v344, 7
        %v346 = vsub.s32 %v343, %v345
        %v347 = vrot.slane %v339, %v346
        %v349 = vunpack.c.l.s4 1966171168
        %v350 = vunpack.c.0.s8 %v349
        %v351 = vlaneseq
        %v352 = vshrl.u32 %v351, 7
        %v353 = vsub.s32 %v350, %v352
        %v354 = vrot.slane %v340, %v353
        %v355 = vcombine.high %v347, %v347
        %v357 = vunpack.c.l.s4 1966171168
        %v358 = vunpack.c.0.s8 %v357
        %v359 = vlaneseq
        %v360 = vshrl.u32 %v359, 7
        %v361 = vsub.s32 %v358, %v360
        %v362 = vrot.slane %v328, %v361
        %v363 = vcombine.high %v362, %v362
        %v365 = vunpack.c.l.s4 1966171168
        %v366 = vunpack.c.0.s8 %v365
        %v367 = vlaneseq
        %v368 = vshrl.u32 %v367, 7
        %v369 = vsub.s32 %v366, %v368
        %v370 = vrot.slane %v362, %v369
        %v372 = vunpack.c.l.s4 1966171168
        %v373 = vunpack.c.0.s8 %v372
        %v374 = vlaneseq
        %v375 = vshrl.u32 %v374, 7
        %v376 = vsub.s32 %v373, %v375
        %v377 = vrot.slane %v363, %v376
        %v378 = vcombine.high %v370, %v370
        %v380 = vunpack.c.l.s4 1966171168
        %v381 = vunpack.c.0.s8 %v380
        %v382 = vlaneseq
        %v383 = vshrl.u32 %v382, 7
        %v384 = vsub.s32 %v381, %v383
        %v385 = vrot.slane %v332, %v384
        %v386 = vcombine.high %v385, %v385
        %v388 = vunpack.c.l.s4 1966171168
        %v389 = vunpack.c.0.s8 %v388
        %v390 = vlaneseq
        %v391 = vshrl.u32 %v390, 7
        %v392 = vsub.s32 %v389, %v391
        %v393 = vrot.slane %v385, %v392
        %v395 = vunpack.c.l.s4 1966171168
        %v396 = vunpack.c.0.s8 %v395
        %v397 = vlaneseq
        %v398 = vshrl.u32 %v397, 7
        %v399 = vsub.s32 %v396, %v398
        %v400 = vrot.slane %v386, %v399
        %v401 = vcombine.high %v393, %v393
        %v411 = vrot.slane %v296, 5
        %v413 = vrot.slane %v296, 2
        %vm415 = vcmask 1042432
        %v416 = vsel %vm415, %v296, %v411
        %vm417 = vcmask 1045504
        %v418 = vsel %vm417, %v416, %v413
        %v420 = vcombine.high %v418, %v418
        %v422 = vunpack.c.l.s4 1966171168
        %v423 = vunpack.c.0.s8 %v422
        %v424 = vlaneseq
        %v425 = vshrl.u32 %v424, 7
        %v426 = vsub.s32 %v423, %v425
        %v427 = vrot.slane %v418, %v426
        %v429 = vunpack.c.l.s4 1966171168
        %v430 = vunpack.c.0.s8 %v429
        %v431 = vlaneseq
        %v432 = vshrl.u32 %v431, 7
        %v433 = vsub.s32 %v430, %v432
        %v434 = vrot.slane %v420, %v433
        %v435 = vcombine.high %v427, %v427
        %v436 = vcombine.high %v434, %v434
        %v438 = vunpack.c.l.s4 1966171168
        %v439 = vunpack.c.0.s8 %v438
        %v440 = vlaneseq
        %v441 = vshrl.u32 %v440, 7
        %v442 = vsub.s32 %v439, %v441
        %v443 = vrot.slane %v427, %v442
        %v445 = vunpack.c.l.s4 1966171168
        %v446 = vunpack.c.0.s8 %v445
        %v447 = vlaneseq
        %v448 = vshrl.u32 %v447, 7
        %v449 = vsub.s32 %v446, %v448
        %v450 = vrot.slane %v434, %v449
        %v452 = vunpack.c.l.s4 1966171168
        %v453 = vunpack.c.0.s8 %v452
        %v454 = vlaneseq
        %v455 = vshrl.u32 %v454, 7
        %v456 = vsub.s32 %v453, %v455
        %v457 = vrot.slane %v435, %v456
        %v459 = vunpack.c.l.s4 1966171168
        %v460 = vunpack.c.0.s8 %v459
        %v461 = vlaneseq
        %v462 = vshrl.u32 %v461, 7
        %v463 = vsub.s32 %v460, %v462
        %v464 = vrot.slane %v436, %v463
        %v465 = vcombine.high %v443, %v443
        %v466 = vcombine.high %v450, %v450
        %v467 = vcombine.high %v457, %v457
        %v468 = vcombine.high %v464, %v464
        %v470 = vunpack.c.l.s4 1966171168
        %v471 = vunpack.c.0.s8 %v470
        %v472 = vlaneseq
        %v473 = vshrl.u32 %v472, 7
        %v474 = vsub.s32 %v471, %v473
        %v475 = vrot.slane %v413, %v474
        %v477 = vunpack.c.l.s4 1966171168
        %v478 = vunpack.c.0.s8 %v477
        %v479 = vlaneseq
        %v480 = vshrl.u32 %v479, 7
        %v481 = vsub.s32 %v478, %v480
        %v482 = vrot.slane %v475, %v481
        %v492 = vmul.f32 %v347, %v443
        %v493 = vmul.f32 %v354, %v457
        %v494 = vmul.f32 %v355, %v465
        %v495 = vmul.f32 %v370, %v467
        %v496 = vmul.f32 %v377, %v450
        %v497 = vmul.f32 %v378, %v464
        %v498 = vmul.f32 %v393, %v466
        %v499 = vmul.f32 %v400, %v468
        %v500 = vmul.f32 %v401, %v482
        %v501 = vrot.slane %v296, 7
        %v512 = vcombine.low %v492, %v493
        %v513 = vcombine.low %v494, %v495
        %v515 = vunpack.c.l.s4 1966171168
        %v516 = vunpack.c.0.s8 %v515
        %v517 = vlaneseq
        %v518 = vshrl.u32 %v517, 7
        %v519 = vsub.s32 %v516, %v518
        %v520 = vrot.slane %v512, %v519
        %v522 = vunpack.c.l.s4 1966171168
        %v523 = vunpack.c.0.s8 %v522
        %v524 = vlaneseq
        %v525 = vshrl.u32 %v524, 7
        %v526 = vsub.s32 %v523, %v525
        %v527 = vrot.slane %v513, %v526
        %v528 = vcombine.low %v520, %v527
        %v530 = vunpack.c.l.s4 1966171168
        %v531 = vunpack.c.0.s8 %v530
        %v532 = vlaneseq
        %v533 = vshrl.u32 %v532, 7
        %v534 = vsub.s32 %v531, %v533
        %v535 = vrot.slane %v528, %v534
        %v536 = vcombine.low %v535, %v535
        %v537 = vcombine.low %v496, %v497
        %v538 = vcombine.low %v498, %v499
        %v540 = vunpack.c.l.s4 1966171168
        %v541 = vunpack.c.0.s8 %v540
        %v542 = vlaneseq
        %v543 = vshrl.u32 %v542, 7
        %v544 = vsub.s32 %v541, %v543
        %v545 = vrot.slane %v537, %v544
        %v547 = vunpack.c.l.s4 1966171168
        %v548 = vunpack.c.0.s8 %v547
        %v549 = vlaneseq
        %v550 = vshrl.u32 %v549, 7
        %v551 = vsub.s32 %v548, %v550
        %v552 = vrot.slane %v538, %v551
        %v554 = vunpack.c.l.s4 1966171168
        %v555 = vunpack.c.0.s8 %v554
        %v556 = vlaneseq
        %v557 = vshrl.u32 %v556, 7
        %v558 = vsub.s32 %v555, %v557
        %v559 = vrot.slane %v500, %v558
        %v560 = vcombine.low %v545, %v552
        %v562 = vunpack.c.l.s4 1966171168
        %v563 = vunpack.c.0.s8 %v562
        %v564 = vlaneseq
        %v565 = vshrl.u32 %v564, 7
        %v566 = vsub.s32 %v563, %v565
        %v567 = vrot.slane %v560, %v566
        %v569 = vunpack.c.l.s4 1966171168
        %v570 = vunpack.c.0.s8 %v569
        %v571 = vlaneseq
        %v572 = vshrl.u32 %v571, 7
        %v573 = vsub.s32 %v570, %v572
        %v574 = vrot.slane %v559, %v573
        %v575 = vcombine.low %v567, %v574
        %v578 = vsel %vm293, 1.0, %v501
        %vm579 = vcmask 1043456
        %v580 = vsel %vm579, %v578, %v536
        %v581 = vlaneseq
        %v582 = vshrl.u32 %v581, 7
        %v583 = vadd.s32 %v582, 8
        %v584 = vadd.s32 %v582, 16
        %v585 = vadd.s32 %v582, 24
        %v586 = vadd.s32 %v582, 32
        %v587 = vadd.s32 %v582, 40
        %v588 = vadd.s32 %v582, 48
        %v589 = vadd.s32 %v582, 56
        %v590 = vadd.s32 %v582, 64
        %v591 = vadd.s32 %v582, 72
        %v592 = vadd.s32 %v582, 80
        %v593 = vadd.s32 %v582, 88
        %v594 = vadd.s32 %v582, 96
        %v595 = vadd.s32 %v582, 104
        %v596 = vadd.s32 %v582, 112
        %v597 = vadd.s32 %v582, 120
        %v598 = vlaneseq
        %v599 = vshrl.u32 %v598, 7
        %v600 = vsub.s32 0, %v599
        %v601 = vrot.slane %v290, %v600
        %vm602 = vcmp.eq.s32.totalorder %v582, %v601
        %vm603 = vcmp.eq.s32.totalorder %v583, %v601
        %vm604 = vcmp.eq.s32.totalorder %v584, %v601
        %vm605 = vcmp.eq.s32.totalorder %v585, %v601
        %vm606 = vcmp.eq.s32.totalorder %v586, %v601
        %vm607 = vcmp.eq.s32.totalorder %v587, %v601
        %vm608 = vcmp.eq.s32.totalorder %v588, %v601
        %vm609 = vcmp.eq.s32.totalorder %v589, %v601
        %vm610 = vcmp.eq.s32.totalorder %v590, %v601
        %vm611 = vcmp.eq.s32.totalorder %v591, %v601
        %vm612 = vcmp.eq.s32.totalorder %v592, %v601
        %vm613 = vcmp.eq.s32.totalorder %v593, %v601
        %vm614 = vcmp.eq.s32.totalorder %v594, %v601
        %vm615 = vcmp.eq.s32.totalorder %v595, %v601
        %vm616 = vcmp.eq.s32.totalorder %v596, %v601
        %vm617 = vcmp.eq.s32.totalorder %v597, %v601
        %v618 = vsel %vm602, 1, 0
        %v619 = vsel %vm603, 1, 0
        %v620 = vsel %vm604, 1, 0
        %v621 = vsel %vm605, 1, 0
        %v622 = vsel %vm606, 1, 0
        %v623 = vsel %vm607, 1, 0
        %v624 = vsel %vm608, 1, 0
        %v625 = vsel %vm609, 1, 0
        %v626 = vsel %vm610, 1, 0
        %v627 = vsel %vm611, 1, 0
        %v628 = vsel %vm612, 1, 0
        %v629 = vsel %vm613, 1, 0
        %v630 = vsel %vm614, 1, 0
        %v631 = vsel %vm615, 1, 0
        %v632 = vsel %vm616, 1, 0
        %v633 = vsel %vm617, 1, 0
        %v634 = vcvt.s32.f32 %v618
        %v635 = vcvt.s32.f32 %v619
        %v636 = vcvt.s32.f32 %v620
        %v637 = vcvt.s32.f32 %v621
        %v638 = vcvt.s32.f32 %v622
        %v639 = vcvt.s32.f32 %v623
        %v640 = vcvt.s32.f32 %v624
        %v641 = vcvt.s32.f32 %v625
        %v642 = vcvt.s32.f32 %v626
        %v643 = vcvt.s32.f32 %v627
        %v644 = vcvt.s32.f32 %v628
        %v645 = vcvt.s32.f32 %v629
        %v646 = vcvt.s32.f32 %v630
        %v647 = vcvt.s32.f32 %v631
        %v648 = vcvt.s32.f32 %v632
        %v649 = vcvt.s32.f32 %v633
        %v650 = vld [vmem:[%s280] sm:$0xff]
        %v651 = vld [vmem:[%s280 + $0x8] sm:$0x1f]
        %652 = vmatprep.subr.mxu0 0.0
        %653 = vmatpush1.xpose.msra.mxu0 %v634
        %654 = vmatprep.subr.mxu0 0.0
        %655 = vmatpush1.xpose.msra.mxu0 %v635
        %656 = vmatprep.subr.mxu0 0.0
        %657 = vmatpush1.xpose.msra.mxu0 %v636
        %658 = vmatprep.subr.mxu0 0.0
        %659 = vmatpush1.xpose.msra.mxu0 %v637
        %660 = vmatprep.subr.mxu0 0.0
        %661 = vmatpush1.xpose.msra.mxu0 %v638
        %662 = vmatprep.subr.mxu0 0.0
        %663 = vmatpush1.xpose.msra.mxu0 %v639
        %664 = vmatprep.subr.mxu0 0.0
        %665 = vmatpush1.xpose.msra.mxu0 %v640
        %666 = vmatprep.subr.mxu0 0.0
        %667 = vmatpush1.xpose.msra.mxu0 %v641
        %668 = vmatprep.subr.mxu0 0.0
        %669 = vmatpush1.xpose.msra.mxu0 %v642
        %670 = vmatprep.subr.mxu0 0.0
        %671 = vmatpush1.xpose.msra.mxu0 %v643
        %672 = vmatprep.subr.mxu0 0.0
        %673 = vmatpush1.xpose.msra.mxu0 %v644
        %674 = vmatprep.subr.mxu0 0.0
        %675 = vmatpush1.xpose.msra.mxu0 %v645
        %676 = vmatprep.subr.mxu0 0.0
        %677 = vmatpush1.xpose.msra.mxu0 %v646
        %678 = vmatprep.subr.mxu0 0.0
        %679 = vmatpush1.xpose.msra.mxu0 %v647
        %680 = vmatprep.subr.mxu0 0.0
        %681 = vmatpush1.xpose.msra.mxu0 %v648
        %682 = vmatprep.subr.mxu0 0.0
        %683 = vmatpush1.xpose.msra.mxu0 %v649
        %684 = vmatprep.subr.mxu0 0.0
        %685 = vmatpush1.xpose.msra.mxu0 0.0
        %686 = vmatprep.subr.mxu0 0.0
        %687 = vmatpush1.xpose.msra.mxu0 0.0
        %688 = vmatprep.subr.mxu0 0.0
        %689 = vmatpush1.xpose.msra.mxu0 0.0
        %690 = vmatprep.subr.mxu0 0.0
        %691 = vmatpush1.xpose.msra.mxu0 0.0
        %692 = vmatprep.subr.mxu0 0.0
        %693 = vmatpush1.xpose.msra.mxu0 0.0
        %694 = vmatprep.subr.mxu0 0.0
        %695 = vmatpush1.xpose.msra.mxu0 0.0
        %696 = vmatprep.subr.mxu0 0.0
        %697 = vmatpush1.xpose.msra.mxu0 0.0
        %698 = vmatprep.subr.mxu0 0.0
        %699 = vmatpush1.xpose.msra.mxu0 0.0
        %700 = vmatprep.subr.mxu0 0.0
        %701 = vmatpush1.xpose.msra.mxu0 0.0
        %702 = vmatprep.subr.mxu0 0.0
        %703 = vmatpush1.xpose.msra.mxu0 0.0
        %704 = vmatprep.subr.mxu0 0.0
        %705 = vmatpush1.xpose.msra.mxu0 0.0
        %706 = vmatprep.subr.mxu0 0.0
        %707 = vmatpush1.xpose.msra.mxu0 0.0
        %708 = vmatprep.subr.mxu0 0.0
        %709 = vmatpush1.xpose.msra.mxu0 0.0
        %710 = vmatprep.subr.mxu0 0.0
        %711 = vmatpush1.xpose.msra.mxu0 0.0
        %712 = vmatprep.subr.mxu0 0.0
        %713 = vmatpush1.xpose.msra.mxu0 0.0
        %714 = vmatprep.subr.mxu0 0.0
        %715 = vmatpush1.xpose.msra.mxu0 0.0
        %716 = vmatprep.mubr.f32.mxu0 0.0
        %717 = vmatmul.mubr.f32.gmra.mrb[0].mxu0 %v580
        %v718 = vpop.f32.mrb[0].mxu0
        %v719 = vadd.f32 0.0, %v718
        %v720 = vpop.f32.mrb[0].mxu0
        %721 = vmatprep.mubr.f32.mxu0 0.0
        %722 = vmatmul.mubr.f32.gmra.mrb[0].mxu0 %v575
        %v723 = vpop.f32.mrb[0].mxu0
        %v724 = vadd.f32 0.0, %v723
        %v725 = vpop.f32.mrb[0].mxu0
        %726 = vdwg.mxu0
        %v727 = vadd.f32 %v650, %v719
        %v728 = vadd.f32 %v651, %v724
        %729 = vst [vmem:[%s280] sm:$0xff] %v727
        %730 = vst [vmem:[%s280 + $0x8] sm:$0x1f] %v728
        %p731 = scmp.lt.s32.totalorder %s24, 1
        %s732 = scalar_select %p731, %s24, 1
        %s733 = smul.addr %s732, 2
        %s734 = smul.addr %s733, 8
        %s735 = scalar_lea.vmem %s3, %s734
        // Predicated region
        $region45: #{tpu_custom_call.1} parent=31 // pred_check
          %p736 = pneg %p140
        $region46: #{tpu_custom_call.1} parent=31 // pred_check_branch
          %738 = sbr.rel (%p736) target = $region48
        $region47: #{tpu_custom_call.1} parent=31 // pred_region
          _
        $region48: #{tpu_custom_call.1} parent=31 // pred_fallthru
          _
      $region32: #{tpu_custom_call.1} parent=5 // pred_fallthru
        _
      %p739 = scmp.le.s32.totalorder 2, %s15
      // Predicated region
      $region49: #{tpu_custom_call.1} parent=5 // pred_check
        %p740 = pneg %p739
      $region50: #{tpu_custom_call.1} parent=5 // pred_check_branch
        %742 = sbr.rel (%p740) target = $region52
      $region51: #{tpu_custom_call.1} parent=5 // pred_region
        %s743 = ssub.s32 %s15, 2
        // Predicated region
        $region53: #{tpu_custom_call.1} parent=51 // pred_check
          %p744 = pneg %p146
        $region54: #{tpu_custom_call.1} parent=51 // pred_check_branch
          %746 = sbr.rel (%p744) target = $region56
        $region55: #{tpu_custom_call.1} parent=51 // pred_region
          %p747 = scmp.lt.s32.totalorder %s26, 1
          %s748 = scalar_select %p747, %s26, 1
          %s749 = smul.addr %s748, 2
          %s750 = smul.addr %s749, 8
          %s751 = scalar_lea.vmem %s3, %s750
        $region56: #{tpu_custom_call.1} parent=51 // pred_fallthru
          _
      $region52: #{tpu_custom_call.1} parent=5 // pred_fallthru
        _
    $region6: #{tpu_custom_call.1} parent=1 // loop_footer
      %s19 = sadd.s32 1, %s15
    $region7: #{tpu_custom_call.1} parent=1 // loop_footer_branch
      %14 = sbr.rel target = $region3
    $region8: #{tpu_custom_call.1} parent=1 // loop_exit
      _
    %752 = vsyncpa [#allocation3], 1
    %s753 = scalar_lea.sflag [#allocation3], 1
    %754 = vsyncpa %s753, 1
    %755 = vsyncpa [#allocation5], 1
    %s756 = scalar_lea.sflag [#allocation5], 1
    %757 = vsyncpa %s756, 1

</llo_original>
